<compile_context>
chip_gen: v5e
topology: v5e:2x2
jax: 0.10.0
libtpu: 0.0.40
codegen_flags: <defaults>
</compile_context>

<pallas_src>
import functools

import jax
import jax.numpy as jnp
import numpy as np
from jax.experimental import pallas as pl
from jax.experimental.pallas import tpu as pltpu


def _round_up(x: int, m: int) -> int:
    return ((x + m - 1) // m) * m


def linrelu_kernel(x_ref, b_ref, w_ref, g_ref, o_ref):
    # x_ref: (TB, 1) VMEM   b_ref: (1,) SMEM   w_ref/g_ref: (1, O_pad) VMEM
    # o_ref: (TB, O_pad) VMEM
    x = x_ref[...].astype(jnp.float32)                       # (TB, 1)
    bias = b_ref[0]                                          # scalar (in_features == 1)
    new_w = (w_ref[...] * g_ref[...]).astype(jnp.float32)    # torch.mul(self.weights, weights)
    out = (x - bias) * new_w                                 # broadcast (TB,1)*(1,O) -> (TB,O)
    o_ref[...] = jnp.maximum(out, 0.0).astype(o_ref.dtype)   # F.relu


def linrelu_forward(x, bias, weights, gate, *, tile_b=None, out_dtype=None):
    """x: (B, 1), bias: (1,), weights/gate: (1, O)  ->  (B, O)."""
    B, I = x.shape
    assert I == 1, "batched LinReLU.forward is only broadcast-valid for in_features == 1"
    Iw, O = weights.shape
    assert Iw == I and gate.shape == weights.shape and bias.shape == (I,)
    out_dtype = jnp.dtype(out_dtype) if out_dtype is not None else jnp.dtype(x.dtype)
    out_itemsize = out_dtype.itemsize

    # Lane-dense output: pad the feature dim to a multiple of 128 (no masked stores).
    O_pad = max(128, _round_up(O, 128))

    # Batch tile: big (MiB-scale output block) but capped so the double-buffered
    # output block stays <= ~24 MiB (vmem_limit_bytes below is raised to cover it
    # on all of v5e / v6e / v7x).
    max_tile_from_vmem = max(8, ((24 * 1024 * 1024) // (2 * O_pad * out_itemsize)) // 8 * 8)
    if tile_b is None:
        tile_b = min(4096, max_tile_from_vmem)
        B8 = _round_up(B, 8)
        if B8 < 2 * tile_b:
            # Avoid over-padding small batches; keep >= 2 grid blocks when the
            # batch allows so v7x's 2 TensorCores both get work.
            tile_b = _round_up(max(8, (B8 + 1) // 2), 8) if B8 >= 16 else B8
    tile_b = max(8, _round_up(int(tile_b), 8))
    tile_b = min(tile_b, max_tile_from_vmem)

    B_pad = _round_up(B, tile_b)
    grid = (B_pad // tile_b,)

    # Wrapper-side padding (sliced off below only if we padded).
    x_p = x if B_pad == B else jnp.pad(x, ((0, B_pad - B), (0, 0)))
    if O_pad != O:
        w_p = jnp.pad(weights, ((0, 0), (0, O_pad - O)))
        g_p = jnp.pad(gate, ((0, 0), (0, O_pad - O)))
    else:
        w_p, g_p = weights, gate

    cost = pl.CostEstimate(
        flops=3 * B_pad * O_pad,
        transcendentals=0,
        bytes_accessed=(x_p.size * x_p.dtype.itemsize
                        + bias.size * bias.dtype.itemsize
                        + w_p.size * w_p.dtype.itemsize
                        + g_p.size * g_p.dtype.itemsize
                        + B_pad * O_pad * out_itemsize),
    )

    out = pl.pallas_call(
        linrelu_kernel,
        out_shape=jax.ShapeDtypeStruct((B_pad, O_pad), out_dtype),
        grid_spec=pltpu.PrefetchScalarGridSpec(
            num_scalar_prefetch=0,
            grid=grid,
            in_specs=[
                pl.BlockSpec((tile_b, 1), lambda i: (i, 0)),              # inputs tile
                pl.BlockSpec(memory_space=pltpu.MemorySpace.SMEM),        # bias scalar
                pl.BlockSpec((1, O_pad), lambda i: (0, 0)),               # self.weights
                pl.BlockSpec((1, O_pad), lambda i: (0, 0)),               # forward-arg weights
            ],
            out_specs=pl.BlockSpec((tile_b, O_pad), lambda i: (i, 0)),
        ),
        compiler_params=pltpu.CompilerParams(
            dimension_semantics=("parallel",),
            vmem_limit_bytes=40 * 1024 * 1024,   # safe on v5e/v6e/v7x, covers the 24 MiB cap
        ),
        cost_estimate=cost,
    )(x_p, bias, w_p, g_p)

    if B_pad != B or O_pad != O:
        out = out[:B, :O]
    return out


def init_params(key, in_features, out_features, dtype=jnp.float32):
    kw, kb = jax.random.split(key)
    # torch.nn.init.xavier_uniform_
    bound = float(np.sqrt(6.0 / (in_features + out_features)))
    W = jax.random.uniform(kw, (in_features, out_features), dtype, -bound, bound)
    # torch.nn.init.trunc_normal_(std=0.5): normal(0, 0.5) truncated at +/- 2 = 4 std
    b = 0.5 * jax.random.truncated_normal(kb, -4.0, 4.0, (in_features,), dtype)
    return W, b


def _reference(x, bias, W, gate):
    return jnp.maximum((x - bias) * (W * gate), 0.0)


if __name__ == "__main__":
    key = jax.random.PRNGKey(0)
    kx, kg, kp, kx2, kg2, kp2 = jax.random.split(key, 6)

    # Small config exercising both padding paths: batch not a multiple of the
    # tile, out_features < 128 (lane padding).
    in_features, out_features, batch = 1, 32, 10
    W, bias = init_params(kp, in_features, out_features)
    x = jax.random.normal(kx, (batch, in_features), jnp.float32)             # inputs
    gate = jax.random.normal(kg, (in_features, out_features), jnp.float32)   # forward `weights`

    out = jax.block_until_ready(linrelu_forward(x, bias, W, gate))
    ref = _reference(x, bias, W, gate)
    np.testing.assert_allclose(np.asarray(out), np.asarray(ref), rtol=1e-6, atol=1e-6)

    # Second (still small) config exercising the big-tile / multi-block path.
    in_features2, out_features2, batch2 = 1, 128, 4096
    W2, bias2 = init_params(kp2, in_features2, out_features2)
    x2 = jax.random.normal(kx2, (batch2, in_features2), jnp.float32)
    gate2 = jax.random.normal(kg2, (in_features2, out_features2), jnp.float32)

    out2 = jax.block_until_ready(linrelu_forward(x2, bias2, W2, gate2))
    ref2 = _reference(x2, bias2, W2, gate2)
    np.testing.assert_allclose(np.asarray(out2), np.asarray(ref2), rtol=1e-6, atol=1e-6)

    print("KERNEL_OK")
</pallas_src>

<mosaic_0001>
module attributes {stable_mosaic.version = 11 : i64} {
  func.func @linrelu_kernel(%arg0: i32, %arg1: memref<8x1xf32, #tpu.memory_space<vmem>>, %arg2: memref<1xf32, #tpu.memory_space<smem>>, %arg3: memref<1x128xf32, #tpu.memory_space<vmem>>, %arg4: memref<1x128xf32, #tpu.memory_space<vmem>>, %arg5: memref<8x128xf32, #tpu.memory_space<vmem>>) attributes {dimension_semantics = [#tpu.dimension_semantics<parallel>], iteration_bounds = array<i64: 2>, scalar_prefetch = 0 : i64, scratch_operands = 0 : i64, tpu.core_type = #tpu.core_type<tc>, window_params = [{transform_indices = @transform_0, window_bounds = array<i64: 8, 1>}, {transform_indices = @transform_1, window_bounds = array<i64: 1>}, {pipeline_mode = #tpu.pipeline_mode<synchronous>, transform_indices = @transform_2, window_bounds = array<i64: 1, 128>}, {pipeline_mode = #tpu.pipeline_mode<synchronous>, transform_indices = @transform_3, window_bounds = array<i64: 1, 128>}, {transform_indices = @transform_4, window_bounds = array<i64: 8, 128>}]} {
    %c0 = arith.constant 0 : index
    %c0_0 = arith.constant 0 : index
    %0 = vector.load %arg1[%c0, %c0_0] : memref<8x1xf32, #tpu.memory_space<vmem>>, vector<8x1xf32>
    %c0_1 = arith.constant 0 : index
    %1 = memref.load %arg2[%c0_1] : memref<1xf32, #tpu.memory_space<smem>>
    %c0_2 = arith.constant 0 : index
    %c0_3 = arith.constant 0 : index
    %2 = vector.load %arg3[%c0_2, %c0_3] : memref<1x128xf32, #tpu.memory_space<vmem>>, vector<1x128xf32>
    %c0_4 = arith.constant 0 : index
    %c0_5 = arith.constant 0 : index
    %3 = vector.load %arg4[%c0_4, %c0_5] : memref<1x128xf32, #tpu.memory_space<vmem>>, vector<1x128xf32>
    %4 = arith.mulf %2, %3 : vector<1x128xf32>
    %5 = vector.broadcast %1 : f32 to vector<8x1xf32>
    %6 = arith.subf %0, %5 : vector<8x1xf32>
    %7 = vector.broadcast %6 : vector<8x1xf32> to vector<8x128xf32>
    %8 = vector.broadcast %4 : vector<1x128xf32> to vector<8x128xf32>
    %9 = arith.mulf %7, %8 : vector<8x128xf32>
    %cst = arith.constant 0.000000e+00 : f32
    %10 = vector.broadcast %cst : f32 to vector<8x128xf32>
    %11 = arith.maximumf %9, %10 : vector<8x128xf32>
    %c0_6 = arith.constant 0 : index
    %c0_7 = arith.constant 0 : index
    %12 = vector.load %arg5[%c0_6, %c0_7] : memref<8x128xf32, #tpu.memory_space<vmem>>, vector<8x128xf32>
    tpu.vector_store %arg5[%c0_6, %c0_7], %11 {strides = array<i32>} : memref<8x128xf32, #tpu.memory_space<vmem>>, vector<8x128xf32>,
    return
  }
  func.func @transform_0(%arg0: i32) -> (i32, i32) {
    %c0_i32 = arith.constant 0 : i32
    %c0_i32_0 = arith.constant 0 : i32
    return %arg0, %c0_i32 : i32, i32
  }
  func.func @transform_1(%arg0: i32) -> i32 {
    %c0_i32 = arith.constant 0 : i32
    %c0_i32_0 = arith.constant 0 : i32
    return %c0_i32 : i32
  }
  func.func @transform_2(%arg0: i32) -> (i32, i32) {
    %c0_i32 = arith.constant 0 : i32
    %c0_i32_0 = arith.constant 0 : i32
    %c0_i32_1 = arith.constant 0 : i32
    return %c0_i32, %c0_i32_0 : i32, i32
  }
  func.func @transform_3(%arg0: i32) -> (i32, i32) {
    %c0_i32 = arith.constant 0 : i32
    %c0_i32_0 = arith.constant 0 : i32
    %c0_i32_1 = arith.constant 0 : i32
    return %c0_i32, %c0_i32_0 : i32, i32
  }
  func.func @transform_4(%arg0: i32) -> (i32, i32) {
    %c0_i32 = arith.constant 0 : i32
    %c0_i32_0 = arith.constant 0 : i32
    return %arg0, %c0_i32 : i32, i32
  }
}

</mosaic_0001>

<llo_original>
// kernel: tpu_custom_call.1
$region0: #{tpu_custom_call.1}
  #allocation0 [shape = 'u32[]', space=smem, size = 0x4, offset = 0x4, fixed_abs, tag = 'smem constant byte address 0x4 - core index']
  #allocation1 [shape = 'u32[72,128]{1,0:T(1,128)}', space=vmem, size = 0x9000, scoped, tag = 'internal scratch']
  #allocation2 [shape = 'f32[1]{0:T(128)S(6)}', space=smem, size = 0x200, scoped, tag = 'scoped memory for tpu_custom_call.1']
  %s0 = inlined_call_operand.vmem [shape: f32[16,1], index: 0, kind: input, shape index: {}]
  %s1 = inlined_call_operand.<no memory space> [shape: f32[1], index: 1, kind: input, shape index: {}]
  %s2 = inlined_call_operand.vmem [shape: f32[1,128], index: 2, kind: input, shape index: {}]
  %s3 = inlined_call_operand.vmem [shape: f32[1,128], index: 3, kind: input, shape index: {}]
  %s4 = inlined_call_operand.hbm [shape: f32[16,128], index: 4, kind: output, shape index: {}]
  %s5 = sld [smem:[#allocation0]]
  $region49: #{tpu_custom_call.1} parent=0
    _
  %s7 = ssub.s32 1, %s5
  %s8 = scalar_select 0, %s7, %s5
  %9 = sst [smem:[#allocation2]] %s1
  $region1: #{tpu_custom_call.1} parent=0
    #allocation3 [shape = 'u8[8192]{0}', space=vmem, size = 0x2000, scoped, tag = 'output window, operand 0']
    #allocation4 [shape = 's32[2]{0}', space=sflag, size = 0x8, scoped, tag = 'scoped memory for tpu_custom_call.1']
    %10 = vsyncpa [#allocation4], 0
    %s11 = scalar_lea.sflag [#allocation4], 1
    %12 = vsyncpa %s11, 0
    loop: start=0, step=1, limit=4
    $region2: #{tpu_custom_call.1} parent=1 // loop_pre_header
      _
    $region3: #{tpu_custom_call.1} parent=1 // loop_header
      %s14 = sphi 0, %s18
      %p15 = scmp.ge.s32.totalorder %s14, 4
      %s24 = sphi 0, %s26
      %s27 = sphi 0, %s24
      %s28 = sphi 0, %s27
      %s44 = sphi 0, %s28
      %s48 = sphi 0, %s48
      %s50 = sphi 0, %s48
      %s51 = sphi 0, %s50
      %s65 = sphi 0, %s51
      %s69 = sphi 0, %s69
      %s71 = sphi 0, %s69
      %s72 = sphi 0, %s71
      %s86 = sphi 0, %s72
      %s90 = sphi 0, %s90
      %s92 = sphi 0, %s90
      %s93 = sphi 0, %s92
      %s107 = sphi 0, %s93
      %s113 = sphi 0, %s115
      %s116 = sphi 0, %s113
      %s117 = sphi 0, %s116
      %s133 = sphi 0, %s117
    $region4: #{tpu_custom_call.1} parent=1 // loop_header_branch
      %17 = sbr.rel (%p15) target = $region8
    $region5: #{tpu_custom_call.1} parent=1 // loop_body
      %s19 = ssub.s32 %s14, 1
      %s20 = ssub.s32 %s14, 2
      %s21 = sadd.s32 %s14, 1
      %s22 = ssub.s32 %s14, %s21
      %p23 = scmp.eq.s32.totalorder %s22, 0
      %s25 = sadd.s32 %s24, 1
      %s26 = scalar_select %p23, %s24, %s25
      %p29 = pneg %p23
      %p30 = scmp.eq.s32.totalorder %s14, 1
      %p31 = por %p29, %p30
      %p32 = scmp.ne.s32.totalorder %s24, %s27
      %p33 = scmp.eq.s32.totalorder %s14, 0
      %p34 = por %p32, %p33
      %p35 = scmp.ne.s32.totalorder %s24, %s27
      %p36 = scmp.eq.s32.totalorder %s19, 1
      %p37 = por %p35, %p36
      %p38 = scmp.ne.s32.totalorder %s27, %s28
      %p39 = scmp.eq.s32.totalorder %s19, 0
      %p40 = por %p38, %p39
      %p41 = scmp.ne.s32.totalorder %s27, %s28
      %p42 = scmp.eq.s32.totalorder %s20, 1
      %p43 = por %p41, %p42
      %p45 = scmp.ne.s32.totalorder %s28, %s44
      %p46 = scmp.eq.s32.totalorder %s20, 0
      %p47 = por %p45, %p46
      %s49 = sadd.s32 %s48, 1
      %p52 = scmp.eq.s32.totalorder %s14, 1
      %p53 = scmp.ne.s32.totalorder %s48, %s50
      %p54 = scmp.eq.s32.totalorder %s14, 0
      %p55 = por %p53, %p54
      %p56 = scmp.ne.s32.totalorder %s48, %s50
      %p57 = scmp.eq.s32.totalorder %s19, 1
      %p58 = por %p56, %p57
      %p59 = scmp.ne.s32.totalorder %s50, %s51
      %p60 = scmp.eq.s32.totalorder %s19, 0
      %p61 = por %p59, %p60
      %p62 = scmp.ne.s32.totalorder %s50, %s51
      %p63 = scmp.eq.s32.totalorder %s20, 1
      %p64 = por %p62, %p63
      %p66 = scmp.ne.s32.totalorder %s51, %s65
      %p67 = scmp.eq.s32.totalorder %s20, 0
      %p68 = por %p66, %p67
      %s70 = sadd.s32 %s69, 1
      %p73 = scmp.eq.s32.totalorder %s14, 1
      %p74 = scmp.ne.s32.totalorder %s69, %s71
      %p75 = scmp.eq.s32.totalorder %s14, 0
      %p76 = por %p74, %p75
      %p77 = scmp.ne.s32.totalorder %s69, %s71
      %p78 = scmp.eq.s32.totalorder %s19, 1
      %p79 = por %p77, %p78
      %p80 = scmp.ne.s32.totalorder %s71, %s72
      %p81 = scmp.eq.s32.totalorder %s19, 0
      %p82 = por %p80, %p81
      %p83 = scmp.ne.s32.totalorder %s71, %s72
      %p84 = scmp.eq.s32.totalorder %s20, 1
      %p85 = por %p83, %p84
      %p87 = scmp.ne.s32.totalorder %s72, %s86
      %p88 = scmp.eq.s32.totalorder %s20, 0
      %p89 = por %p87, %p88
      %s91 = sadd.s32 %s90, 1
      %p94 = scmp.eq.s32.totalorder %s14, 1
      %p95 = scmp.ne.s32.totalorder %s90, %s92
      %p96 = scmp.eq.s32.totalorder %s14, 0
      %p97 = por %p95, %p96
      %p98 = scmp.ne.s32.totalorder %s90, %s92
      %p99 = scmp.eq.s32.totalorder %s19, 1
      %p100 = por %p98, %p99
      %p101 = scmp.ne.s32.totalorder %s92, %s93
      %p102 = scmp.eq.s32.totalorder %s19, 0
      %p103 = por %p101, %p102
      %p104 = scmp.ne.s32.totalorder %s92, %s93
      %p105 = scmp.eq.s32.totalorder %s20, 1
      %p106 = por %p104, %p105
      %p108 = scmp.ne.s32.totalorder %s93, %s107
      %p109 = scmp.eq.s32.totalorder %s20, 0
      %p110 = por %p108, %p109
      %s111 = ssub.s32 %s14, %s21
      %p112 = scmp.eq.s32.totalorder %s111, 0
      %s114 = sadd.s32 %s113, 1
      %s115 = scalar_select %p112, %s113, %s114
      %p118 = pneg %p112
      %p119 = scmp.eq.s32.totalorder %s14, 1
      %p120 = por %p118, %p119
      %p121 = scmp.ne.s32.totalorder %s113, %s116
      %p122 = scmp.eq.s32.totalorder %s14, 0
      %p123 = por %p121, %p122
      %p124 = scmp.ne.s32.totalorder %s113, %s116
      %p125 = scmp.eq.s32.totalorder %s19, 1
      %p126 = por %p124, %p125
      %p127 = scmp.ne.s32.totalorder %s116, %s117
      %p128 = scmp.eq.s32.totalorder %s19, 0
      %p129 = por %p127, %p128
      %p130 = scmp.ne.s32.totalorder %s116, %s117
      %p131 = scmp.eq.s32.totalorder %s20, 1
      %p132 = por %p130, %p131
      %p134 = scmp.ne.s32.totalorder %s117, %s133
      %p135 = scmp.eq.s32.totalorder %s20, 0
      %p136 = por %p134, %p135
      %p137 = scmp.le.s32.totalorder 1, %s14
      %p138 = scmp.lt.s32.totalorder %s14, 3
      %p139 = pnand %p137, %p138
      %p140 = pneg %p139
      // Predicated region
      $region9: #{tpu_custom_call.1} parent=5 // pred_check
        _
      $region10: #{tpu_custom_call.1} parent=5 // pred_check_branch
        %142 = sbr.rel (%p139) target = $region12
      $region11: #{tpu_custom_call.1} parent=5 // pred_region
        %s143 = ssub.s32 %s14, 1
        // Predicated region
        $region13: #{tpu_custom_call.1} parent=11 // pred_check
          %p144 = pneg %p61
        $region14: #{tpu_custom_call.1} parent=11 // pred_check_branch
          %146 = sbr.rel (%p144) target = $region16
        $region15: #{tpu_custom_call.1} parent=11 // pred_region
          _
        $region16: #{tpu_custom_call.1} parent=11 // pred_fallthru
          _
        // Predicated region
        $region17: #{tpu_custom_call.1} parent=11 // pred_check
          %p147 = pneg %p82
        $region18: #{tpu_custom_call.1} parent=11 // pred_check_branch
          %149 = sbr.rel (%p147) target = $region20
        $region19: #{tpu_custom_call.1} parent=11 // pred_region
          _
        $region20: #{tpu_custom_call.1} parent=11 // pred_fallthru
          _
        // Predicated region
        $region21: #{tpu_custom_call.1} parent=11 // pred_check
          %p150 = pneg %p103
        $region22: #{tpu_custom_call.1} parent=11 // pred_check_branch
          %152 = sbr.rel (%p150) target = $region24
        $region23: #{tpu_custom_call.1} parent=11 // pred_region
          _
        $region24: #{tpu_custom_call.1} parent=11 // pred_fallthru
          _
      $region12: #{tpu_custom_call.1} parent=5 // pred_fallthru
        _
      %p153 = scmp.lt.s32.totalorder %s14, 2
      // Predicated region
      $region25: #{tpu_custom_call.1} parent=5 // pred_check
        %p154 = pneg %p153
      $region26: #{tpu_custom_call.1} parent=5 // pred_check_branch
        %156 = sbr.rel (%p154) target = $region28
      $region27: #{tpu_custom_call.1} parent=5 // pred_region
        // Predicated region
        $region29: #{tpu_custom_call.1} parent=27 // pred_check
          %p157 = pneg %p34
        $region30: #{tpu_custom_call.1} parent=27 // pred_check_branch
          %159 = sbr.rel (%p157) target = $region32
        $region31: #{tpu_custom_call.1} parent=27 // pred_region
          %p160 = scmp.lt.s32.totalorder %s14, 1
          %s161 = scalar_select %p160, %s14, 1
          %s162 = smul.addr %s161, 8
          %s163 = scalar_lea.vmem %s0, %s162
        $region32: #{tpu_custom_call.1} parent=27 // pred_fallthru
          _
      $region28: #{tpu_custom_call.1} parent=5 // pred_fallthru
        _
      %p164 = scmp.le.s32.totalorder 1, %s14
      %p165 = scmp.lt.s32.totalorder %s14, 3
      %p166 = pnand %p164, %p165
      %p167 = pneg %p166
      // Predicated region
      $region33: #{tpu_custom_call.1} parent=5 // pred_check
        _
      $region34: #{tpu_custom_call.1} parent=5 // pred_check_branch
        %169 = sbr.rel (%p166) target = $region36
      $region35: #{tpu_custom_call.1} parent=5 // pred_region
        %s170 = ssub.s32 %s14, 1
        %p171 = scmp.lt.s32.totalorder %s19, 1
        %s172 = scalar_select %p171, %s19, 1
        %s173 = smul.addr %s172, 8
        %s174 = scalar_lea.vmem %s0, %s173
        %p175 = pneg %p40
        %p176 = pneg %p37
        %p177 = pneg %p61
        %p178 = pneg %p58
        %p179 = pneg %p82
        %p180 = pneg %p79
        %p181 = pneg %p103
        %p182 = pneg %p100
        %p183 = pneg %p129
        %p184 = pneg %p126
        %s185 = sand.u32 %s116, 1
        %s186 = scalar_lea.sflag [#allocation4], %s185
        %s187 = sand.u32 %s116, 1
        %s188 = smul.addr %s187, 8
        %s189 = scalar_lea.vmem [#allocation3], %s188
        %p190 = scmp.lt.s32.totalorder %s19, 1
        %s191 = scalar_select %p190, %s19, 1
        %s192 = smul.addr %s191, 8
        %s193 = scalar_lea.vmem %s0, %s192
        %v194 = vld [vmem:[%s193] sm:$0xff]
        %s195 = sld [smem:[#allocation2]]
        %v196 = vld [vmem:[%s2] sm:$0x1]
        %v197 = vld [vmem:[%s3] sm:$0x1]
        %v198 = vmul.f32 %v196, %v197
        %v199 = vstv %s195
        %v200 = vsub.f32 %v194, %v199
        %202 = vset.pattern.permute.xlu0 0
        %203 = vperm.xlu0 %202, %v200
        %v204 = vpop.permute.xlu0 %203
        %v207 = vperm.slane %v198, 0
        %v209 = vmul.f32 %v204, %v207
        %v210 = vmax.f32 %v209, 0.0
        %211 = vst [vmem:[%s189] sm:$0xff] %v210
        %s212 = sand.u32 %s116, 1
        %s213 = scalar_lea.sflag [#allocation4], %s212
        %s214 = sand.u32 %s116, 1
        %s215 = smul.addr %s214, 8
        %s216 = scalar_lea.vmem [#allocation3], %s215
        // Predicated region
        $region37: #{tpu_custom_call.1} parent=35 // pred_check
          %p217 = pneg %p126
        $region38: #{tpu_custom_call.1} parent=35 // pred_check_branch
          %219 = sbr.rel (%p217) target = $region40
        $region39: #{tpu_custom_call.1} parent=35 // pred_region
          %221 = vsyncadd %s213, 0
          %s222 = smul.addr %s19, 8
          %s223 = scalar_lea.hbm %s4, %s222
          %s225 = sshll.u32 %s216, 4
          %s226 = int_to_ptr.vmem [resolvable:$true] %s225
          %s227 = sshll.u32 %s223, 4
          %s228 = int_to_ptr.hbm [resolvable:$true] %s227
          %230 = dma.vmem_to_hbm [thread:$0]  %s226, 128, %s228, %s213
        $region40: #{tpu_custom_call.1} parent=35 // pred_fallthru
          _
      $region36: #{tpu_custom_call.1} parent=5 // pred_fallthru
        _
      %p231 = scmp.le.s32.totalorder 2, %s14
      // Predicated region
      $region41: #{tpu_custom_call.1} parent=5 // pred_check
        %p232 = pneg %p231
      $region42: #{tpu_custom_call.1} parent=5 // pred_check_branch
        %234 = sbr.rel (%p232) target = $region44
      $region43: #{tpu_custom_call.1} parent=5 // pred_region
        %s235 = ssub.s32 %s14, 2
        // Predicated region
        $region45: #{tpu_custom_call.1} parent=43 // pred_check
          %p236 = pneg %p132
        $region46: #{tpu_custom_call.1} parent=43 // pred_check_branch
          %238 = sbr.rel (%p236) target = $region48
        $region47: #{tpu_custom_call.1} parent=43 // pred_region
          %s239 = sand.u32 %s117, 1
          %s240 = scalar_lea.sflag [#allocation4], %s239
          %s241 = sand.u32 %s117, 1
          %s242 = smul.addr %s241, 8
          %s243 = scalar_lea.vmem [#allocation3], %s242
          %245 = dma.done %s240, 128
        $region48: #{tpu_custom_call.1} parent=43 // pred_fallthru
          _
      $region44: #{tpu_custom_call.1} parent=5 // pred_fallthru
        _
    $region6: #{tpu_custom_call.1} parent=1 // loop_footer
      %s18 = sadd.s32 1, %s14
    $region7: #{tpu_custom_call.1} parent=1 // loop_footer_branch
      %13 = sbr.rel target = $region3
    $region8: #{tpu_custom_call.1} parent=1 // loop_exit
      _
    %246 = vsyncpa [#allocation4], 1
    %s247 = scalar_lea.sflag [#allocation4], 1
    %248 = vsyncpa %s247, 1

</llo_original>
